<compile_context>
chip_gen: v6e
topology: v6e:2x2x1
jax: 0.10.0
libtpu: 0.0.40
codegen_flags: <defaults>
</compile_context>

<pallas_src>
import jax
import jax.numpy as jnp
from jax.experimental import pallas as pl
from jax.experimental.pallas import tpu as pltpu


def _round_up(x, m):
    return (x + m - 1) // m * m


def swiglu_kernel(x_ref, wg_ref, bg_ref, wu_ref, bu_ref, wo_ref, bo_ref,
                  o_ref, *scratch):
    """One (row-tile i, hidden-chunk j) grid step.

    The output block index depends only on i, so o_ref (or the f32 scratch
    when the output is not f32) stays resident in VMEM across the whole j
    sweep and acts as the accumulator for the second matmul.
    """
    acc_ref = scratch[0] if scratch else o_ref   # f32 output: accumulate in place
    j = pl.program_id(1)

    @pl.when(j == 0)
    def _():
        acc_ref[...] = jnp.zeros_like(acc_ref)

    x = x_ref[...]                                                     # (tm, D)
    gate = jnp.dot(x, wg_ref[...],
                   preferred_element_type=jnp.float32) + bg_ref[...]  # (tm, th) f32
    up = jnp.dot(x, wu_ref[...],
                 preferred_element_type=jnp.float32) + bu_ref[...]    # (tm, th) f32
    gated = gate * jax.nn.sigmoid(gate) * up                          # SiLU(gate) * up
    # TODO(synk): nn.Dropout(0.1) is identity in eval mode; training-mode parity
    # would need pltpu.prng_seed / prng_random_bits plus a seed input.
    acc_ref[...] += jnp.dot(gated.astype(wo_ref.dtype), wo_ref[...],
                            preferred_element_type=jnp.float32)       # (tm, D) f32

    @pl.when(j == pl.num_programs(1) - 1)
    def _():
        o_ref[...] = (acc_ref[...] + bo_ref[...]).astype(o_ref.dtype)


def _vmem_capacity_bytes():
    """Physical VMEM per TensorCore (128 MiB on v5e/v6e, 64 MiB on v7x)."""
    try:
        cap = getattr(pltpu.get_tpu_info(), "vmem_capacity_bytes", None)
        if cap:
            return int(cap)
    except Exception:
        pass
    try:
        kind = jax.devices()[0].device_kind.lower()
    except Exception:
        kind = ""
    return 64 * 1024 * 1024 if "v7" in kind else 128 * 1024 * 1024


def _vmem_estimate(tm, th, D, x_bytes, w_bytes, out_bytes, use_acc):
    """Accurate working set: double-buffered I/O + weight chunks + f32 temps."""
    return (2 * tm * D * x_bytes                 # x row tile (2 buffers)
            + 2 * tm * D * out_bytes             # output tile (2 buffers)
            + (tm * D * 4 if use_acc else 0)     # f32 accumulator scratch
            + 6 * D * th * w_bytes               # w_gate / w_up / w_out (2 buffers each)
            + 3 * tm * th * 4                    # gate / up / gated f32 intermediates
            + 2 * (2 * th + D) * w_bytes)        # biases (2 buffers)


def _pick_tiles(M, D, H, x_bytes, w_bytes, out_bytes, use_acc, capacity,
                prefer_split):
    """Choose (tm, th).  Weight HBM traffic scales as 1/tm, so maximize tm
    within ~70% of physical VMEM; th mostly sets pipelining granularity."""
    budget = int(capacity * 0.70)

    def est(tm, th):
        return _vmem_estimate(tm, th, D, x_bytes, w_bytes, out_bytes, use_acc)

    th_opts = sorted({t for t in range(128, min(H, 1024) + 1, 128)
                      if H % t == 0} or {H}, reverse=True)

    if M <= 1024:
        # One exact block over all rows (block dim == full array dim is legal
        # for any size); smaller fallbacks only if VMEM is tight.
        tm_opts = [M] + [t for t in (768, 512, 256) if t < M]
    else:
        tm_opts = ([t for t in (1024, 768, 512, 256) if M % t == 0]
                   or [1024, 768, 512, 256])   # ragged tail -> masked partial tile
    if prefer_split and M > 512:
        # v7x: keep >= 2 row tiles so the "parallel" axis feeds both TensorCores.
        tm_opts = [t for t in tm_opts if t < M] or tm_opts

    for tm in tm_opts:            # prefer the largest row tile (arithmetic intensity)
        for th in th_opts:        # then the largest hidden chunk that fits
            if est(tm, th) <= budget:
                return tm, th
    return tm_opts[-1], th_opts[-1]


def swiglu_forward(x, wg, bg, wu, bu, wo, bo, *, tm=None, th=None,
                   compute_dtype=None):
    """x: [B, S, D]; weights stored [in, out]; biases [1, out]."""
    B, S, D = x.shape
    H = wg.shape[1]
    M = B * S
    out_dtype = x.dtype

    # Optional (flagged) numerics change: run the matmuls in bf16 to halve the
    # dominant weight HBM traffic.  f32 MXU accumulation & output dtype kept.
    if compute_dtype is not None and x.dtype != compute_dtype:
        x = x.astype(compute_dtype)
        wg, wu, wo = (w.astype(compute_dtype) for w in (wg, wu, wo))

    # Rare fallback: large hidden dims that are not lane-aligned get padded with
    # zero columns/rows (exact: zero gate/up columns contribute nothing).
    if H % 128 != 0 and H > 512:
        Hp = _round_up(H, 128)
        wg = jnp.pad(wg, ((0, 0), (0, Hp - H)))
        wu = jnp.pad(wu, ((0, 0), (0, Hp - H)))
        bg = jnp.pad(bg, ((0, 0), (0, Hp - H)))
        bu = jnp.pad(bu, ((0, 0), (0, Hp - H)))
        wo = jnp.pad(wo, ((0, Hp - H), (0, 0)))
        H = Hp

    x_bytes = x.dtype.itemsize
    w_bytes = wg.dtype.itemsize
    out_bytes = out_dtype.itemsize
    use_acc = out_dtype != jnp.float32       # f32 outputs accumulate into o_ref
    sub = 16 if x_bytes == 2 else 8          # bf16 sublane packing is 16 rows

    capacity = _vmem_capacity_bytes()
    prefer_split = capacity <= 64 * 1024 * 1024      # v7x: 2 TCs per chip
    auto_tm, auto_th = _pick_tiles(M, D, H, x_bytes, w_bytes, out_bytes,
                                   use_acc, capacity, prefer_split)
    if tm is None:
        tm = auto_tm
    else:
        tm = min(int(tm), M)
        if tm < M:
            tm = max(sub, (tm // sub) * sub)
    if th is None or H % th != 0 or (th % 128 != 0 and th != H):
        th = auto_th

    vmem_est = _vmem_estimate(tm, th, D, x_bytes, w_bytes, out_bytes, use_acc)
    vmem_limit = min(int(vmem_est * 1.25) + (1 << 20), int(capacity * 0.92))
    vmem_limit = max(vmem_limit, 32 * 1024 * 1024)

    x2 = x.reshape(M, D)                 # free reshape; no jnp.pad HBM round-trip
    n_rows = -(-M // tm)
    grid = (n_rows, H // th)

    cost = pl.CostEstimate(
        flops=6 * M * D * H,                                   # gate + up + out matmuls
        transcendentals=M * H,                                 # sigmoid
        bytes_accessed=int(M * D * (x_bytes + out_bytes)       # x + out, one pass
                           + n_rows * (3 * D * H + 2 * H + D) * w_bytes))  # re-streamed

    scratch_shapes = [pltpu.VMEM((tm, D), jnp.float32)] if use_acc else []

    out = pl.pallas_call(
        swiglu_kernel,
        out_shape=jax.ShapeDtypeStruct((M, D), out_dtype),
        grid_spec=pltpu.PrefetchScalarGridSpec(
            num_scalar_prefetch=0,
            grid=grid,
            in_specs=[
                pl.BlockSpec((tm, D), lambda i, j: (i, 0)),   # x rows (resident over j)
                pl.BlockSpec((D, th), lambda i, j: (0, j)),   # w_gate chunk
                pl.BlockSpec((1, th), lambda i, j: (0, j)),   # b_gate chunk
                pl.BlockSpec((D, th), lambda i, j: (0, j)),   # w_up chunk
                pl.BlockSpec((1, th), lambda i, j: (0, j)),   # b_up chunk
                pl.BlockSpec((th, D), lambda i, j: (j, 0)),   # w_out chunk
                pl.BlockSpec((1, D), lambda i, j: (0, 0)),    # b_out (resident)
            ],
            out_specs=pl.BlockSpec((tm, D), lambda i, j: (i, 0)),
            scratch_shapes=scratch_shapes,
        ),
        compiler_params=pltpu.CompilerParams(
            dimension_semantics=("parallel", "arbitrary"),
            vmem_limit_bytes=int(vmem_limit)),
        cost_estimate=cost,
    )(x2, wg, bg, wu, bu, wo, bo)

    return out.reshape(B, S, D)


def init_params(key, dim, hidden_dim, dtype=jnp.float32):
    """Deterministic Linear-layer params; stored as [in, out] for the kernel."""
    ks = jax.random.split(key, 6)

    def lin(kw, kb, fan_in, fan_out):
        bound = 1.0 / (fan_in ** 0.5)
        w = jax.random.uniform(kw, (fan_in, fan_out), dtype, -bound, bound)
        b = jax.random.uniform(kb, (1, fan_out), dtype, -bound, bound)
        return w, b

    wg, bg = lin(ks[0], ks[1], dim, hidden_dim)
    wu, bu = lin(ks[2], ks[3], dim, hidden_dim)
    wo, bo = lin(ks[4], ks[5], hidden_dim, dim)
    return wg, bg, wu, bu, wo, bo


def _reference(x, wg, bg, wu, bu, wo, bo):
    B, S, D = x.shape
    x2 = x.reshape(-1, D).astype(jnp.float32)
    gate = x2 @ wg.astype(jnp.float32) + bg.astype(jnp.float32)
    up = x2 @ wu.astype(jnp.float32) + bu.astype(jnp.float32)
    out = (jax.nn.silu(gate) * up) @ wo.astype(jnp.float32) + bo.astype(jnp.float32)
    return out.reshape(B, S, D)


if __name__ == "__main__":
    key = jax.random.PRNGKey(0)
    B, S, D, H = 2, 8, 128, 256
    kx, kp = jax.random.split(key)
    x = jax.random.normal(kx, (B, S, D), jnp.float32)
    wg, bg, wu, bu, wo, bo = init_params(kp, D, H)

    # 1) f32, H forced into 2 chunks: exercises init/accumulate/finalize with the
    #    output block itself as the f32 accumulator (no scratch).
    y = swiglu_forward(x, wg, bg, wu, bu, wo, bo, th=128)
    jax.block_until_ready(y)
    ref = _reference(x, wg, bg, wu, bu, wo, bo)
    assert jnp.allclose(y, ref, atol=1e-4, rtol=1e-4), "mismatch (f32, split H)"

    # 2) Ragged row count (M = 18): handled without any jnp.pad HBM round-trip.
    x_rag = jax.random.normal(kx, (2, 9, D), jnp.float32)
    y_rag = swiglu_forward(x_rag, wg, bg, wu, bu, wo, bo)
    jax.block_until_ready(y_rag)
    ref_rag = _reference(x_rag, wg, bg, wu, bu, wo, bo)
    assert jnp.allclose(y_rag, ref_rag, atol=1e-4, rtol=1e-4), "mismatch (ragged M)"

    # 3) bf16 params + activations: exercises the f32 VMEM scratch accumulator
    #    path and 16-row sublane tiling.
    xb = x.astype(jnp.bfloat16)
    pb = [p.astype(jnp.bfloat16) for p in (wg, bg, wu, bu, wo, bo)]
    yb = swiglu_forward(xb, *pb)
    jax.block_until_ready(yb)
    assert jnp.allclose(yb.astype(jnp.float32), ref, atol=1e-1, rtol=1e-1), \
        "mismatch (bf16 params)"

    # 4) f32 model with bf16 compute (the traffic-saving option from the review).
    yc = swiglu_forward(x, wg, bg, wu, bu, wo, bo, compute_dtype=jnp.bfloat16)
    jax.block_until_ready(yc)
    assert yc.dtype == x.dtype
    assert jnp.allclose(yc, ref, atol=1e-1, rtol=1e-1), "mismatch (bf16 compute)"

    print("KERNEL_OK")
</pallas_src>

<mosaic_0001>
module attributes {stable_mosaic.version = 11 : i64} {
  func.func @swiglu_kernel(%arg0: i32, %arg1: i32, %arg2: memref<16x128xf32, #tpu.memory_space<vmem>>, %arg3: memref<128x128xf32, #tpu.memory_space<vmem>>, %arg4: memref<1x128xf32, #tpu.memory_space<vmem>>, %arg5: memref<128x128xf32, #tpu.memory_space<vmem>>, %arg6: memref<1x128xf32, #tpu.memory_space<vmem>>, %arg7: memref<128x128xf32, #tpu.memory_space<vmem>>, %arg8: memref<1x128xf32, #tpu.memory_space<vmem>>, %arg9: memref<16x128xf32, #tpu.memory_space<vmem>>) attributes {dimension_semantics = [#tpu.dimension_semantics<parallel>, #tpu.dimension_semantics<arbitrary>], iteration_bounds = array<i64: 1, 2>, scalar_prefetch = 0 : i64, scratch_operands = 0 : i64, tpu.core_type = #tpu.core_type<tc>, window_params = [{transform_indices = @transform_0, window_bounds = array<i64: 16, 128>}, {transform_indices = @transform_1, window_bounds = array<i64: 128, 128>}, {transform_indices = @transform_2, window_bounds = array<i64: 1, 128>}, {transform_indices = @transform_3, window_bounds = array<i64: 128, 128>}, {transform_indices = @transform_4, window_bounds = array<i64: 1, 128>}, {transform_indices = @transform_5, window_bounds = array<i64: 128, 128>}, {pipeline_mode = #tpu.pipeline_mode<synchronous>, transform_indices = @transform_6, window_bounds = array<i64: 1, 128>}, {transform_indices = @transform_7, window_bounds = array<i64: 16, 128>}]} {
    %c0_i32 = arith.constant 0 : i32
    %0 = arith.cmpi eq, %arg1, %c0_i32 : i32
    %1 = arith.extui %0 : i1 to i32
    %c0_i32_0 = arith.constant 0 : i32
    %2 = arith.cmpi ne, %1, %c0_i32_0 : i32
    scf.if %2 {
      %cst_20 = arith.constant 0.000000e+00 : f32
      %29 = vector.broadcast %cst_20 : f32 to vector<16x128xf32>
      %c0_21 = arith.constant 0 : index
      %c0_22 = arith.constant 0 : index
      %30 = vector.load %arg9[%c0_21, %c0_22] : memref<16x128xf32, #tpu.memory_space<vmem>>, vector<16x128xf32>
      tpu.vector_store %arg9[%c0_21, %c0_22], %29 {strides = array<i32>} : memref<16x128xf32, #tpu.memory_space<vmem>>, vector<16x128xf32>,
    } else {
    }
    %c0 = arith.constant 0 : index
    %c0_1 = arith.constant 0 : index
    %3 = vector.load %arg2[%c0, %c0_1] : memref<16x128xf32, #tpu.memory_space<vmem>>, vector<16x128xf32>
    %c0_2 = arith.constant 0 : index
    %c0_3 = arith.constant 0 : index
    %4 = vector.load %arg3[%c0_2, %c0_3] : memref<128x128xf32, #tpu.memory_space<vmem>>, vector<128x128xf32>
    %cst = arith.constant dense<0.000000e+00> : vector<16x128xf32>
    %5 = tpu.matmul %3, %4, %cst {dimension_numbers = #tpu.dot_dimension_numbers<[1], [0], [0], [1], [0, 0, 1, 1], [], []>} : vector<16x128xf32>, vector<128x128xf32>, vector<16x128xf32> -> vector<16x128xf32>
    %c0_4 = arith.constant 0 : index
    %c0_5 = arith.constant 0 : index
    %6 = vector.load %arg4[%c0_4, %c0_5] : memref<1x128xf32, #tpu.memory_space<vmem>>, vector<1x128xf32>
    %7 = vector.broadcast %6 : vector<1x128xf32> to vector<16x128xf32>
    %8 = arith.addf %5, %7 : vector<16x128xf32>
    %c0_6 = arith.constant 0 : index
    %c0_7 = arith.constant 0 : index
    %9 = vector.load %arg5[%c0_6, %c0_7] : memref<128x128xf32, #tpu.memory_space<vmem>>, vector<128x128xf32>
    %cst_8 = arith.constant dense<0.000000e+00> : vector<16x128xf32>
    %10 = tpu.matmul %3, %9, %cst_8 {dimension_numbers = #tpu.dot_dimension_numbers<[1], [0], [0], [1], [0, 0, 1, 1], [], []>} : vector<16x128xf32>, vector<128x128xf32>, vector<16x128xf32> -> vector<16x128xf32>
    %c0_9 = arith.constant 0 : index
    %c0_10 = arith.constant 0 : index
    %11 = vector.load %arg6[%c0_9, %c0_10] : memref<1x128xf32, #tpu.memory_space<vmem>>, vector<1x128xf32>
    %12 = vector.broadcast %11 : vector<1x128xf32> to vector<16x128xf32>
    %13 = arith.addf %10, %12 : vector<16x128xf32>
    %14 = arith.negf %8 : vector<16x128xf32>
    %15 = math.exp %14 : vector<16x128xf32>
    %cst_11 = arith.constant 1.000000e+00 : f32
    %16 = vector.broadcast %cst_11 : f32 to vector<16x128xf32>
    %17 = arith.addf %16, %15 : vector<16x128xf32>
    %18 = arith.divf %16, %17 : vector<16x128xf32>
    %19 = arith.mulf %8, %18 : vector<16x128xf32>
    %20 = arith.mulf %19, %13 : vector<16x128xf32>
    %c0_12 = arith.constant 0 : index
    %c0_13 = arith.constant 0 : index
    %21 = vector.load %arg9[%c0_12, %c0_13] : memref<16x128xf32, #tpu.memory_space<vmem>>, vector<16x128xf32>
    %c0_14 = arith.constant 0 : index
    %c0_15 = arith.constant 0 : index
    %22 = vector.load %arg7[%c0_14, %c0_15] : memref<128x128xf32, #tpu.memory_space<vmem>>, vector<128x128xf32>
    %cst_16 = arith.constant dense<0.000000e+00> : vector<16x128xf32>
    %23 = tpu.matmul %20, %22, %cst_16 {dimension_numbers = #tpu.dot_dimension_numbers<[1], [0], [0], [1], [0, 0, 1, 1], [], []>} : vector<16x128xf32>, vector<128x128xf32>, vector<16x128xf32> -> vector<16x128xf32>
    %24 = arith.addf %21, %23 : vector<16x128xf32>
    %c0_17 = arith.constant 0 : index
    %c0_18 = arith.constant 0 : index
    %25 = vector.load %arg9[%c0_17, %c0_18] : memref<16x128xf32, #tpu.memory_space<vmem>>, vector<16x128xf32>
    tpu.vector_store %arg9[%c0_17, %c0_18], %24 {strides = array<i32>} : memref<16x128xf32, #tpu.memory_space<vmem>>, vector<16x128xf32>,
    %c1_i32 = arith.constant 1 : i32
    %26 = arith.cmpi eq, %arg1, %c1_i32 : i32
    %27 = arith.extui %26 : i1 to i32
    %c0_i32_19 = arith.constant 0 : i32
    %28 = arith.cmpi ne, %27, %c0_i32_19 : i32
    scf.if %28 {
      %c0_20 = arith.constant 0 : index
      %c0_21 = arith.constant 0 : index
      %29 = vector.load %arg9[%c0_20, %c0_21] : memref<16x128xf32, #tpu.memory_space<vmem>>, vector<16x128xf32>
      %c0_22 = arith.constant 0 : index
      %c0_23 = arith.constant 0 : index
      %30 = vector.load %arg8[%c0_22, %c0_23] : memref<1x128xf32, #tpu.memory_space<vmem>>, vector<1x128xf32>
      %31 = vector.broadcast %30 : vector<1x128xf32> to vector<16x128xf32>
      %32 = arith.addf %29, %31 : vector<16x128xf32>
      %c0_24 = arith.constant 0 : index
      %c0_25 = arith.constant 0 : index
      %33 = vector.load %arg9[%c0_24, %c0_25] : memref<16x128xf32, #tpu.memory_space<vmem>>, vector<16x128xf32>
      tpu.vector_store %arg9[%c0_24, %c0_25], %32 {strides = array<i32>} : memref<16x128xf32, #tpu.memory_space<vmem>>, vector<16x128xf32>,
    } else {
    }
    return
  }
  func.func @transform_0(%arg0: i32, %arg1: i32) -> (i32, i32) {
    %c0_i32 = arith.constant 0 : i32
    %c0_i32_0 = arith.constant 0 : i32
    return %arg0, %c0_i32 : i32, i32
  }
  func.func @transform_1(%arg0: i32, %arg1: i32) -> (i32, i32) {
    %c0_i32 = arith.constant 0 : i32
    %c0_i32_0 = arith.constant 0 : i32
    return %c0_i32, %arg1 : i32, i32
  }
  func.func @transform_2(%arg0: i32, %arg1: i32) -> (i32, i32) {
    %c0_i32 = arith.constant 0 : i32
    %c0_i32_0 = arith.constant 0 : i32
    return %c0_i32, %arg1 : i32, i32
  }
  func.func @transform_3(%arg0: i32, %arg1: i32) -> (i32, i32) {
    %c0_i32 = arith.constant 0 : i32
    %c0_i32_0 = arith.constant 0 : i32
    return %c0_i32, %arg1 : i32, i32
  }
  func.func @transform_4(%arg0: i32, %arg1: i32) -> (i32, i32) {
    %c0_i32 = arith.constant 0 : i32
    %c0_i32_0 = arith.constant 0 : i32
    return %c0_i32, %arg1 : i32, i32
  }
  func.func @transform_5(%arg0: i32, %arg1: i32) -> (i32, i32) {
    %c0_i32 = arith.constant 0 : i32
    %c0_i32_0 = arith.constant 0 : i32
    return %arg1, %c0_i32 : i32, i32
  }
  func.func @transform_6(%arg0: i32, %arg1: i32) -> (i32, i32) {
    %c0_i32 = arith.constant 0 : i32
    %c0_i32_0 = arith.constant 0 : i32
    %c0_i32_1 = arith.constant 0 : i32
    return %c0_i32, %c0_i32_0 : i32, i32
  }
  func.func @transform_7(%arg0: i32, %arg1: i32) -> (i32, i32) {
    %c0_i32 = arith.constant 0 : i32
    %c0_i32_0 = arith.constant 0 : i32
    return %arg0, %c0_i32 : i32, i32
  }
}

</mosaic_0001>

<llo_original>
// kernel: tpu_custom_call.1
$region0: #{tpu_custom_call.1}
  #allocation0 [shape = 'u32[]', space=smem, size = 0x4, offset = 0x4, fixed_abs, tag = 'smem constant byte address 0x4 - core index']
  #allocation1 [shape = 'u32[144,128]{1,0:T(1,128)}', space=vmem, size = 0x12000, scoped, tag = 'internal scratch']
  %s0 = inlined_call_operand.hbm [shape: f32[16,128], index: 0, kind: input, shape index: {}]
  %s1 = inlined_call_operand.hbm [shape: f32[128,256], index: 1, kind: input, shape index: {}]
  %s2 = inlined_call_operand.vmem [shape: f32[1,256], index: 2, kind: input, shape index: {}]
  %s3 = inlined_call_operand.hbm [shape: f32[128,256], index: 3, kind: input, shape index: {}]
  %s4 = inlined_call_operand.vmem [shape: f32[1,256], index: 4, kind: input, shape index: {}]
  %s5 = inlined_call_operand.hbm [shape: f32[256,128], index: 5, kind: input, shape index: {}]
  %s6 = inlined_call_operand.vmem [shape: f32[1,128], index: 6, kind: input, shape index: {}]
  %s7 = inlined_call_operand.hbm [shape: f32[16,128], index: 7, kind: output, shape index: {}]
  %s8 = sld [smem:[#allocation0]]
  $region85: #{tpu_custom_call.1} parent=0
    _
  %s10 = ssub.s32 1, %s8
  %s11 = scalar_select 0, %s10, %s8
  $region1: #{tpu_custom_call.1} parent=0
    #allocation2 [shape = 'u8[8192]{0}', space=vmem, size = 0x2000, scoped, tag = 'input window, operand 0, single buffered']
    #allocation3 [shape = 's32[2]{0}', space=sflag, size = 0x8, scoped, tag = 'scoped memory for tpu_custom_call.1']
    #allocation4 [shape = 's32[2]{0}', space=sflag, size = 0x8, scoped, tag = 'scoped memory for tpu_custom_call.1']
    #allocation5 [shape = 'u8[131072]{0}', space=vmem, size = 0x20000, scoped, tag = 'input window, operand 1']
    #allocation6 [shape = 's32[2]{0}', space=sflag, size = 0x8, scoped, tag = 'scoped memory for tpu_custom_call.1']
    #allocation7 [shape = 'u8[131072]{0}', space=vmem, size = 0x20000, scoped, tag = 'input window, operand 3']
    #allocation8 [shape = 'u8[131072]{0}', space=vmem, size = 0x20000, scoped, tag = 'input window, operand 5']
    #allocation9 [shape = 's32[2]{0}', space=sflag, size = 0x8, scoped, tag = 'scoped memory for tpu_custom_call.1']
    #allocation10 [shape = 'u8[8192]{0}', space=vmem, size = 0x2000, scoped, tag = 'output window, operand 0, single buffered']
    %12 = vsyncpa [#allocation3], 0
    %13 = vsyncpa [#allocation6], 0
    %s14 = scalar_lea.sflag [#allocation6], 1
    %15 = vsyncpa %s14, 0
    %16 = vsyncpa [#allocation9], 0
    %s17 = scalar_lea.sflag [#allocation9], 1
    %18 = vsyncpa %s17, 0
    %19 = vsyncpa [#allocation4], 0
    loop: start=0, step=1, limit=4
    $region2: #{tpu_custom_call.1} parent=1 // loop_pre_header
      _
    $region3: #{tpu_custom_call.1} parent=1 // loop_header
      %s21 = sphi 0, %s25
      %p22 = scmp.ge.s32.totalorder %s21, 4
      %s28 = sphi 0, %s40
      %s29 = sphi 0, %s36
      %s30 = sphi 0, %s28
      %s31 = sphi 0, %s29
      %s32 = sphi 0, %s30
      %s33 = sphi 0, %s31
      %s43 = sphi 0, %s45
      %s46 = sphi 0, %s43
      %s47 = sphi 0, %s46
      %s63 = sphi 0, %s47
      %s69 = sphi 0, %s71
      %s72 = sphi 0, %s69
      %s73 = sphi 0, %s72
      %s89 = sphi 0, %s73
      %s95 = sphi 0, %s97
      %s98 = sphi 0, %s95
      %s99 = sphi 0, %s98
      %s115 = sphi 0, %s99
      %s121 = sphi 0, %s123
      %s124 = sphi 0, %s121
      %s125 = sphi 0, %s124
      %s141 = sphi 0, %s125
      %s147 = sphi 0, %s149
      %s150 = sphi 0, %s147
      %s151 = sphi 0, %s150
      %s167 = sphi 0, %s151
      %s173 = sphi 0, %s175
      %s176 = sphi 0, %s173
      %s177 = sphi 0, %s176
      %s193 = sphi 0, %s177
      %s197 = sphi 0, %s197
      %s199 = sphi 0, %s197
      %s200 = sphi 0, %s199
      %s214 = sphi 0, %s200
      %s220 = sphi 0, %s222
      %s223 = sphi 0, %s220
      %s224 = sphi 0, %s223
      %s240 = sphi 0, %s224
    $region4: #{tpu_custom_call.1} parent=1 // loop_header_branch
      %24 = sbr.rel (%p22) target = $region8
    $region5: #{tpu_custom_call.1} parent=1 // loop_body
      %s26 = ssub.s32 %s21, 1
      %s27 = ssub.s32 %s21, 2
      %s34 = sadd.s32 1, %s29
      %p35 = scmp.ge.s32.totalorder %s34, 2
      %s36 = scalar_select %p35, 0, %s34
      %s37 = sadd.s32 1, %s28
      %s38 = scalar_select %p35, %s37, %s28
      %p39 = scmp.ge.s32.totalorder %s38, 1
      %s40 = scalar_select %p39, 0, %s38
      %s41 = ssub.s32 %s28, %s40
      %p42 = scmp.eq.s32.totalorder %s41, 0
      %s44 = sadd.s32 %s43, 1
      %s45 = scalar_select %p42, %s43, %s44
      %p48 = pneg %p42
      %p49 = scmp.eq.s32.totalorder %s21, 1
      %p50 = por %p48, %p49
      %p51 = scmp.ne.s32.totalorder %s43, %s46
      %p52 = scmp.eq.s32.totalorder %s21, 0
      %p53 = por %p51, %p52
      %p54 = scmp.ne.s32.totalorder %s43, %s46
      %p55 = scmp.eq.s32.totalorder %s26, 1
      %p56 = por %p54, %p55
      %p57 = scmp.ne.s32.totalorder %s46, %s47
      %p58 = scmp.eq.s32.totalorder %s26, 0
      %p59 = por %p57, %p58
      %p60 = scmp.ne.s32.totalorder %s46, %s47
      %p61 = scmp.eq.s32.totalorder %s27, 1
      %p62 = por %p60, %p61
      %p64 = scmp.ne.s32.totalorder %s47, %s63
      %p65 = scmp.eq.s32.totalorder %s27, 0
      %p66 = por %p64, %p65
      %s67 = ssub.s32 %s29, %s36
      %p68 = scmp.eq.s32.totalorder %s67, 0
      %s70 = sadd.s32 %s69, 1
      %s71 = scalar_select %p68, %s69, %s70
      %p74 = pneg %p68
      %p75 = scmp.eq.s32.totalorder %s21, 1
      %p76 = por %p74, %p75
      %p77 = scmp.ne.s32.totalorder %s69, %s72
      %p78 = scmp.eq.s32.totalorder %s21, 0
      %p79 = por %p77, %p78
      %p80 = scmp.ne.s32.totalorder %s69, %s72
      %p81 = scmp.eq.s32.totalorder %s26, 1
      %p82 = por %p80, %p81
      %p83 = scmp.ne.s32.totalorder %s72, %s73
      %p84 = scmp.eq.s32.totalorder %s26, 0
      %p85 = por %p83, %p84
      %p86 = scmp.ne.s32.totalorder %s72, %s73
      %p87 = scmp.eq.s32.totalorder %s27, 1
      %p88 = por %p86, %p87
      %p90 = scmp.ne.s32.totalorder %s73, %s89
      %p91 = scmp.eq.s32.totalorder %s27, 0
      %p92 = por %p90, %p91
      %s93 = ssub.s32 %s29, %s36
      %p94 = scmp.eq.s32.totalorder %s93, 0
      %s96 = sadd.s32 %s95, 1
      %s97 = scalar_select %p94, %s95, %s96
      %p100 = pneg %p94
      %p101 = scmp.eq.s32.totalorder %s21, 1
      %p102 = por %p100, %p101
      %p103 = scmp.ne.s32.totalorder %s95, %s98
      %p104 = scmp.eq.s32.totalorder %s21, 0
      %p105 = por %p103, %p104
      %p106 = scmp.ne.s32.totalorder %s95, %s98
      %p107 = scmp.eq.s32.totalorder %s26, 1
      %p108 = por %p106, %p107
      %p109 = scmp.ne.s32.totalorder %s98, %s99
      %p110 = scmp.eq.s32.totalorder %s26, 0
      %p111 = por %p109, %p110
      %p112 = scmp.ne.s32.totalorder %s98, %s99
      %p113 = scmp.eq.s32.totalorder %s27, 1
      %p114 = por %p112, %p113
      %p116 = scmp.ne.s32.totalorder %s99, %s115
      %p117 = scmp.eq.s32.totalorder %s27, 0
      %p118 = por %p116, %p117
      %s119 = ssub.s32 %s29, %s36
      %p120 = scmp.eq.s32.totalorder %s119, 0
      %s122 = sadd.s32 %s121, 1
      %s123 = scalar_select %p120, %s121, %s122
      %p126 = pneg %p120
      %p127 = scmp.eq.s32.totalorder %s21, 1
      %p128 = por %p126, %p127
      %p129 = scmp.ne.s32.totalorder %s121, %s124
      %p130 = scmp.eq.s32.totalorder %s21, 0
      %p131 = por %p129, %p130
      %p132 = scmp.ne.s32.totalorder %s121, %s124
      %p133 = scmp.eq.s32.totalorder %s26, 1
      %p134 = por %p132, %p133
      %p135 = scmp.ne.s32.totalorder %s124, %s125
      %p136 = scmp.eq.s32.totalorder %s26, 0
      %p137 = por %p135, %p136
      %p138 = scmp.ne.s32.totalorder %s124, %s125
      %p139 = scmp.eq.s32.totalorder %s27, 1
      %p140 = por %p138, %p139
      %p142 = scmp.ne.s32.totalorder %s125, %s141
      %p143 = scmp.eq.s32.totalorder %s27, 0
      %p144 = por %p142, %p143
      %s145 = ssub.s32 %s29, %s36
      %p146 = scmp.eq.s32.totalorder %s145, 0
      %s148 = sadd.s32 %s147, 1
      %s149 = scalar_select %p146, %s147, %s148
      %p152 = pneg %p146
      %p153 = scmp.eq.s32.totalorder %s21, 1
      %p154 = por %p152, %p153
      %p155 = scmp.ne.s32.totalorder %s147, %s150
      %p156 = scmp.eq.s32.totalorder %s21, 0
      %p157 = por %p155, %p156
      %p158 = scmp.ne.s32.totalorder %s147, %s150
      %p159 = scmp.eq.s32.totalorder %s26, 1
      %p160 = por %p158, %p159
      %p161 = scmp.ne.s32.totalorder %s150, %s151
      %p162 = scmp.eq.s32.totalorder %s26, 0
      %p163 = por %p161, %p162
      %p164 = scmp.ne.s32.totalorder %s150, %s151
      %p165 = scmp.eq.s32.totalorder %s27, 1
      %p166 = por %p164, %p165
      %p168 = scmp.ne.s32.totalorder %s151, %s167
      %p169 = scmp.eq.s32.totalorder %s27, 0
      %p170 = por %p168, %p169
      %s171 = ssub.s32 %s29, %s36
      %p172 = scmp.eq.s32.totalorder %s171, 0
      %s174 = sadd.s32 %s173, 1
      %s175 = scalar_select %p172, %s173, %s174
      %p178 = pneg %p172
      %p179 = scmp.eq.s32.totalorder %s21, 1
      %p180 = por %p178, %p179
      %p181 = scmp.ne.s32.totalorder %s173, %s176
      %p182 = scmp.eq.s32.totalorder %s21, 0
      %p183 = por %p181, %p182
      %p184 = scmp.ne.s32.totalorder %s173, %s176
      %p185 = scmp.eq.s32.totalorder %s26, 1
      %p186 = por %p184, %p185
      %p187 = scmp.ne.s32.totalorder %s176, %s177
      %p188 = scmp.eq.s32.totalorder %s26, 0
      %p189 = por %p187, %p188
      %p190 = scmp.ne.s32.totalorder %s176, %s177
      %p191 = scmp.eq.s32.totalorder %s27, 1
      %p192 = por %p190, %p191
      %p194 = scmp.ne.s32.totalorder %s177, %s193
      %p195 = scmp.eq.s32.totalorder %s27, 0
      %p196 = por %p194, %p195
      %s198 = sadd.s32 %s197, 1
      %p201 = scmp.eq.s32.totalorder %s21, 1
      %p202 = scmp.ne.s32.totalorder %s197, %s199
      %p203 = scmp.eq.s32.totalorder %s21, 0
      %p204 = por %p202, %p203
      %p205 = scmp.ne.s32.totalorder %s197, %s199
      %p206 = scmp.eq.s32.totalorder %s26, 1
      %p207 = por %p205, %p206
      %p208 = scmp.ne.s32.totalorder %s199, %s200
      %p209 = scmp.eq.s32.totalorder %s26, 0
      %p210 = por %p208, %p209
      %p211 = scmp.ne.s32.totalorder %s199, %s200
      %p212 = scmp.eq.s32.totalorder %s27, 1
      %p213 = por %p211, %p212
      %p215 = scmp.ne.s32.totalorder %s200, %s214
      %p216 = scmp.eq.s32.totalorder %s27, 0
      %p217 = por %p215, %p216
      %s218 = ssub.s32 %s28, %s40
      %p219 = scmp.eq.s32.totalorder %s218, 0
      %s221 = sadd.s32 %s220, 1
      %s222 = scalar_select %p219, %s220, %s221
      %p225 = pneg %p219
      %p226 = scmp.eq.s32.totalorder %s21, 1
      %p227 = por %p225, %p226
      %p228 = scmp.ne.s32.totalorder %s220, %s223
      %p229 = scmp.eq.s32.totalorder %s21, 0
      %p230 = por %p228, %p229
      %p231 = scmp.ne.s32.totalorder %s220, %s223
      %p232 = scmp.eq.s32.totalorder %s26, 1
      %p233 = por %p231, %p232
      %p234 = scmp.ne.s32.totalorder %s223, %s224
      %p235 = scmp.eq.s32.totalorder %s26, 0
      %p236 = por %p234, %p235
      %p237 = scmp.ne.s32.totalorder %s223, %s224
      %p238 = scmp.eq.s32.totalorder %s27, 1
      %p239 = por %p237, %p238
      %p241 = scmp.ne.s32.totalorder %s224, %s240
      %p242 = scmp.eq.s32.totalorder %s27, 0
      %p243 = por %p241, %p242
      %p244 = scmp.le.s32.totalorder 1, %s21
      %p245 = scmp.lt.s32.totalorder %s21, 3
      %p246 = pnand %p244, %p245
      %p247 = pneg %p246
      // Predicated region
      $region9: #{tpu_custom_call.1} parent=5 // pred_check
        _
      $region10: #{tpu_custom_call.1} parent=5 // pred_check_branch
        %249 = sbr.rel (%p246) target = $region12
      $region11: #{tpu_custom_call.1} parent=5 // pred_region
        %s250 = ssub.s32 %s21, 1
        // Predicated region
        $region13: #{tpu_custom_call.1} parent=11 // pred_check
          %p251 = pneg %p59
        $region14: #{tpu_custom_call.1} parent=11 // pred_check_branch
          %253 = sbr.rel (%p251) target = $region16
        $region15: #{tpu_custom_call.1} parent=11 // pred_region
          %s254 = smul.u32 2, %s30
          %s256 = ssub.s32 256, 256
          %257 = vsyncadd [#allocation3], %s256
          %s258 = smul.addr %s254, 128
          %s259 = scalar_lea.hbm %s0, %s258
          %s260 = sshll.u32 [#allocation2], 4
          %s261 = int_to_ptr.vmem [resolvable:$true] %s260
          %266 = dma.hbm_to_vmem [thread:$0]  %s259, 256, %s261, [#allocation3], 128, 128, 8
        $region16: #{tpu_custom_call.1} parent=11 // pred_fallthru
          _
        // Predicated region
        $region17: #{tpu_custom_call.1} parent=11 // pred_check
          %p267 = pneg %p210
        $region18: #{tpu_custom_call.1} parent=11 // pred_check_branch
          %269 = sbr.rel (%p267) target = $region20
        $region19: #{tpu_custom_call.1} parent=11 // pred_region
          _
        $region20: #{tpu_custom_call.1} parent=11 // pred_fallthru
          _
      $region12: #{tpu_custom_call.1} parent=5 // pred_fallthru
        _
      %p270 = scmp.lt.s32.totalorder %s21, 2
      // Predicated region
      $region21: #{tpu_custom_call.1} parent=5 // pred_check
        %p271 = pneg %p270
      $region22: #{tpu_custom_call.1} parent=5 // pred_check_branch
        %273 = sbr.rel (%p271) target = $region24
      $region23: #{tpu_custom_call.1} parent=5 // pred_region
        // Predicated region
        $region25: #{tpu_custom_call.1} parent=23 // pred_check
          %p274 = pneg %p79
        $region26: #{tpu_custom_call.1} parent=23 // pred_check_branch
          %276 = sbr.rel (%p274) target = $region28
        $region27: #{tpu_custom_call.1} parent=23 // pred_region
          %s277 = sand.u32 %s21, 1
          %s278 = scalar_lea.sflag [#allocation6], %s277
          %s279 = sand.u32 %s69, 1
          %s280 = smul.addr %s279, 128
          %s281 = scalar_lea.vmem [#allocation5], %s280
          %s283 = ssub.s32 2048, 2048
          %284 = vsyncadd %s278, %s283
          %s285 = smul.addr %s29, 128
          %s286 = scalar_lea.hbm %s1, %s285
          %s287 = sshll.u32 %s281, 4
          %s288 = int_to_ptr.vmem [resolvable:$true] %s287
          %293 = dma.hbm_to_vmem [thread:$0]  %s286, 2048, %s288, %s278, 256, 128, 8
        $region28: #{tpu_custom_call.1} parent=23 // pred_fallthru
          _
        // Predicated region
        $region29: #{tpu_custom_call.1} parent=23 // pred_check
          %p294 = pneg %p105
        $region30: #{tpu_custom_call.1} parent=23 // pred_check_branch
          %296 = sbr.rel (%p294) target = $region32
        $region31: #{tpu_custom_call.1} parent=23 // pred_region
          %p297 = scmp.lt.s32.totalorder %s29, 1
          %s298 = scalar_select %p297, %s29, 1
          %s299 = scalar_lea.vmem %s2, %s298
        $region32: #{tpu_custom_call.1} parent=23 // pred_fallthru
          _
        // Predicated region
        $region33: #{tpu_custom_call.1} parent=23 // pred_check
          %p300 = pneg %p131
        $region34: #{tpu_custom_call.1} parent=23 // pred_check_branch
          %302 = sbr.rel (%p300) target = $region36
        $region35: #{tpu_custom_call.1} parent=23 // pred_region
          %s303 = sand.u32 %s21, 1
          %s304 = scalar_lea.sflag [#allocation6], %s303
          %s305 = sand.u32 %s121, 1
          %s306 = smul.addr %s305, 128
          %s307 = scalar_lea.vmem [#allocation7], %s306
          %s309 = ssub.s32 2048, 2048
          %310 = vsyncadd %s304, %s309
          %s311 = smul.addr %s29, 128
          %s312 = scalar_lea.hbm %s3, %s311
          %s313 = sshll.u32 %s307, 4
          %s314 = int_to_ptr.vmem [resolvable:$true] %s313
          %319 = dma.hbm_to_vmem [thread:$0]  %s312, 2048, %s314, %s304, 256, 128, 8
        $region36: #{tpu_custom_call.1} parent=23 // pred_fallthru
          _
        // Predicated region
        $region37: #{tpu_custom_call.1} parent=23 // pred_check
          %p320 = pneg %p157
        $region38: #{tpu_custom_call.1} parent=23 // pred_check_branch
          %322 = sbr.rel (%p320) target = $region40
        $region39: #{tpu_custom_call.1} parent=23 // pred_region
          %p323 = scmp.lt.s32.totalorder %s29, 1
          %s324 = scalar_select %p323, %s29, 1
          %s325 = scalar_lea.vmem %s4, %s324
        $region40: #{tpu_custom_call.1} parent=23 // pred_fallthru
          _
        // Predicated region
        $region41: #{tpu_custom_call.1} parent=23 // pred_check
          %p326 = pneg %p183
        $region42: #{tpu_custom_call.1} parent=23 // pred_check_branch
          %328 = sbr.rel (%p326) target = $region44
        $region43: #{tpu_custom_call.1} parent=23 // pred_region
          %s329 = sand.u32 %s173, 1
          %s330 = scalar_lea.sflag [#allocation9], %s329
          %s331 = sand.u32 %s173, 1
          %s332 = smul.addr %s331, 128
          %s333 = scalar_lea.vmem [#allocation8], %s332
          %s334 = smul.u32 16, %s29
          %s336 = ssub.s32 2048, 2048
          %337 = vsyncadd %s330, %s336
          %s338 = smul.addr %s334, 128
          %s339 = scalar_lea.hbm %s5, %s338
          %s340 = sshll.u32 %s333, 4
          %s341 = int_to_ptr.vmem [resolvable:$true] %s340
          %346 = dma.hbm_to_vmem [thread:$0]  %s339, 2048, %s341, %s330, 128, 128, 8
        $region44: #{tpu_custom_call.1} parent=23 // pred_fallthru
          _
      $region24: #{tpu_custom_call.1} parent=5 // pred_fallthru
        _
      %p347 = scmp.le.s32.totalorder 1, %s21
      %p348 = scmp.lt.s32.totalorder %s21, 3
      %p349 = pnand %p347, %p348
      %p350 = pneg %p349
      // Predicated region
      $region45: #{tpu_custom_call.1} parent=5 // pred_check
        _
      $region46: #{tpu_custom_call.1} parent=5 // pred_check_branch
        %352 = sbr.rel (%p349) target = $region48
      $region47: #{tpu_custom_call.1} parent=5 // pred_region
        %s353 = ssub.s32 %s21, 1
        // Predicated region
        $region49: #{tpu_custom_call.1} parent=47 // pred_check
          %p354 = pneg %p59
        $region50: #{tpu_custom_call.1} parent=47 // pred_check_branch
          %356 = sbr.rel (%p354) target = $region52
        $region51: #{tpu_custom_call.1} parent=47 // pred_region
          %357 = dma.done [#allocation3], 256
        $region52: #{tpu_custom_call.1} parent=47 // pred_fallthru
          _
        %s358 = sand.u32 %s26, 1
        %s359 = scalar_lea.sflag [#allocation6], %s358
        %s360 = sand.u32 %s72, 1
        %s361 = smul.addr %s360, 128
        %s362 = scalar_lea.vmem [#allocation5], %s361
        // Predicated region
        $region53: #{tpu_custom_call.1} parent=47 // pred_check
          %p363 = pneg %p85
        $region54: #{tpu_custom_call.1} parent=47 // pred_check_branch
          %365 = sbr.rel (%p363) target = $region56
        $region55: #{tpu_custom_call.1} parent=47 // pred_region
          %366 = dma.done %s359, 2048
        $region56: #{tpu_custom_call.1} parent=47 // pred_fallthru
          _
        %s367 = sand.u32 %s26, 1
        %s368 = scalar_lea.sflag [#allocation6], %s367
        %s369 = sand.u32 %s124, 1
        %s370 = smul.addr %s369, 128
        %s371 = scalar_lea.vmem [#allocation7], %s370
        // Predicated region
        $region57: #{tpu_custom_call.1} parent=47 // pred_check
          %p372 = pneg %p137
        $region58: #{tpu_custom_call.1} parent=47 // pred_check_branch
          %374 = sbr.rel (%p372) target = $region60
        $region59: #{tpu_custom_call.1} parent=47 // pred_region
          %375 = dma.done %s368, 2048
        $region60: #{tpu_custom_call.1} parent=47 // pred_fallthru
          _
        %s376 = sand.u32 %s176, 1
        %s377 = scalar_lea.sflag [#allocation9], %s376
        %s378 = sand.u32 %s176, 1
        %s379 = smul.addr %s378, 128
        %s380 = scalar_lea.vmem [#allocation8], %s379
        // Predicated region
        $region61: #{tpu_custom_call.1} parent=47 // pred_check
          %p381 = pneg %p189
        $region62: #{tpu_custom_call.1} parent=47 // pred_check_branch
          %383 = sbr.rel (%p381) target = $region64
        $region63: #{tpu_custom_call.1} parent=47 // pred_region
          %384 = dma.done %s377, 2048
        $region64: #{tpu_custom_call.1} parent=47 // pred_fallthru
          _
        %p385 = pneg %p59
        %p386 = pneg %p56
        %s387 = sand.u32 %s26, 1
        %s388 = scalar_lea.sflag [#allocation6], %s387
        %s389 = sand.u32 %s72, 1
        %s390 = smul.addr %s389, 128
        %s391 = scalar_lea.vmem [#allocation5], %s390
        %p392 = pneg %p85
        %p393 = pneg %p82
        %p394 = scmp.lt.s32.totalorder %s31, 1
        %s395 = scalar_select %p394, %s31, 1
        %s396 = scalar_lea.vmem %s2, %s395
        %p397 = pneg %p111
        %p398 = pneg %p108
        %s399 = sand.u32 %s26, 1
        %s400 = scalar_lea.sflag [#allocation6], %s399
        %s401 = sand.u32 %s124, 1
        %s402 = smul.addr %s401, 128
        %s403 = scalar_lea.vmem [#allocation7], %s402
        %p404 = pneg %p137
        %p405 = pneg %p134
        %p406 = scmp.lt.s32.totalorder %s31, 1
        %s407 = scalar_select %p406, %s31, 1
        %s408 = scalar_lea.vmem %s4, %s407
        %p409 = pneg %p163
        %p410 = pneg %p160
        %s411 = sand.u32 %s176, 1
        %s412 = scalar_lea.sflag [#allocation9], %s411
        %s413 = sand.u32 %s176, 1
        %s414 = smul.addr %s413, 128
        %s415 = scalar_lea.vmem [#allocation8], %s414
        %p416 = pneg %p189
        %p417 = pneg %p186
        %p418 = pneg %p210
        %p419 = pneg %p207
        %p420 = pneg %p236
        %p421 = pneg %p233
        %s422 = smul.u32 2, %s30
        %p423 = scmp.lt.s32.totalorder %s31, 1
        %s424 = scalar_select %p423, %s31, 1
        %s425 = scalar_lea.vmem %s2, %s424
        %p426 = scmp.lt.s32.totalorder %s31, 1
        %s427 = scalar_select %p426, %s31, 1
        %s428 = scalar_lea.vmem %s4, %s427
        %s429 = smul.u32 16, %s31
        %s430 = smul.u32 2, %s30
        %p431 = scmp.eq.s32.totalorder %s31, 0
        // Predicated region
        $region65: #{tpu_custom_call.1} parent=47 // pred_check
          %p432 = pneg %p431
        $region66: #{tpu_custom_call.1} parent=47 // pred_check_branch
          %434 = sbr.rel (%p432) target = $region68
        $region67: #{tpu_custom_call.1} parent=47 // pred_region
          %435 = vst [vmem:[#allocation10] sm:$0xff] 0.0
          %436 = vst [vmem:[#allocation10 + $0x8] sm:$0xff] 0.0
        $region68: #{tpu_custom_call.1} parent=47 // pred_fallthru
          _
        %v437 = vld [vmem:[#allocation2] sm:$0xff]
        %v438 = vld [vmem:[#allocation2 + $0x8] sm:$0xff]
        %v439 = vld [vmem:[%s362] sm:$0xff]
        %v440 = vld [vmem:[%s362 + $0x8] sm:$0xff]
        %v441 = vld [vmem:[%s362 + $0x10] sm:$0xff]
        %v442 = vld [vmem:[%s362 + $0x18] sm:$0xff]
        %v443 = vld [vmem:[%s362 + $0x20] sm:$0xff]
        %v444 = vld [vmem:[%s362 + $0x28] sm:$0xff]
        %v445 = vld [vmem:[%s362 + $0x30] sm:$0xff]
        %v446 = vld [vmem:[%s362 + $0x38] sm:$0xff]
        %v447 = vld [vmem:[%s362 + $0x40] sm:$0xff]
        %v448 = vld [vmem:[%s362 + $0x48] sm:$0xff]
        %v449 = vld [vmem:[%s362 + $0x50] sm:$0xff]
        %v450 = vld [vmem:[%s362 + $0x58] sm:$0xff]
        %v451 = vld [vmem:[%s362 + $0x60] sm:$0xff]
        %v452 = vld [vmem:[%s362 + $0x68] sm:$0xff]
        %v453 = vld [vmem:[%s362 + $0x70] sm:$0xff]
        %v454 = vld [vmem:[%s362 + $0x78] sm:$0xff]
        %v455 = vld [vmem:[%s425] sm:$0x1]
        %v457 = vlaneseq
        %v458 = vshrl.u32 %v457, 7
        %v459 = vsub.s32 0, %v458
        %v460 = vrot.slane %v455, %v459
        %462 = vmatprep.subr.mxu0 0.0
        %463 = vmatpush1.msra.mxu0 %v454
        %464 = vmatprep.subr.mxu0 0.0
        %465 = vmatpush1.msra.mxu0 %v453
        %466 = vmatprep.subr.mxu0 0.0
        %467 = vmatpush1.msra.mxu0 %v452
        %468 = vmatprep.subr.mxu0 0.0
        %469 = vmatpush1.msra.mxu0 %v451
        %470 = vmatprep.subr.mxu0 0.0
        %471 = vmatpush1.msra.mxu0 %v450
        %472 = vmatprep.subr.mxu0 0.0
        %473 = vmatpush1.msra.mxu0 %v449
        %474 = vmatprep.subr.mxu0 0.0
        %475 = vmatpush1.msra.mxu0 %v448
        %476 = vmatprep.subr.mxu0 0.0
        %477 = vmatpush1.msra.mxu0 %v447
        %478 = vmatprep.subr.mxu0 0.0
        %479 = vmatpush1.msra.mxu0 %v446
        %480 = vmatprep.subr.mxu0 0.0
        %481 = vmatpush1.msra.mxu0 %v445
        %482 = vmatprep.subr.mxu0 0.0
        %483 = vmatpush1.msra.mxu0 %v444
        %484 = vmatprep.subr.mxu0 0.0
        %485 = vmatpush1.msra.mxu0 %v443
        %486 = vmatprep.subr.mxu0 0.0
        %487 = vmatpush1.msra.mxu0 %v442
        %488 = vmatprep.subr.mxu0 0.0
        %489 = vmatpush1.msra.mxu0 %v441
        %490 = vmatprep.subr.mxu0 0.0
        %491 = vmatpush1.msra.mxu0 %v440
        %492 = vmatprep.subr.mxu0 0.0
        %493 = vmatpush1.msra.mxu0 %v439
        %494 = vmatprep.subr.mxu0 0.0
        %495 = vmatpush2.msra.mxu0 0.0
        %496 = vmatprep.subr.mxu0 0.0
        %497 = vmatpush2.msra.mxu0 0.0
        %498 = vmatprep.subr.mxu0 0.0
        %499 = vmatpush2.msra.mxu0 0.0
        %500 = vmatprep.subr.mxu0 0.0
        %501 = vmatpush2.msra.mxu0 0.0
        %502 = vmatprep.subr.mxu0 0.0
        %503 = vmatpush2.msra.mxu0 0.0
        %504 = vmatprep.subr.mxu0 0.0
        %505 = vmatpush2.msra.mxu0 0.0
        %506 = vmatprep.subr.mxu0 0.0
        %507 = vmatpush2.msra.mxu0 0.0
        %508 = vmatprep.subr.mxu0 0.0
        %509 = vmatpush2.msra.mxu0 0.0
        %510 = vmatprep.subr.mxu0 0.0
        %511 = vmatpush2.msra.mxu0 0.0
        %512 = vmatprep.subr.mxu0 0.0
        %513 = vmatpush2.msra.mxu0 0.0
        %514 = vmatprep.subr.mxu0 0.0
        %515 = vmatpush2.msra.mxu0 0.0
        %516 = vmatprep.subr.mxu0 0.0
        %517 = vmatpush2.msra.mxu0 0.0
        %518 = vmatprep.subr.mxu0 0.0
        %519 = vmatpush2.msra.mxu0 0.0
        %520 = vmatprep.subr.mxu0 0.0
        %521 = vmatpush2.msra.mxu0 0.0
        %522 = vmatprep.subr.mxu0 0.0
        %523 = vmatpush2.msra.mxu0 0.0
        %524 = vmatprep.subr.mxu0 0.0
        %525 = vmatpush2.msra.mxu0 0.0
        %526 = vmatprep.mubr.f32.mxu0 0.0
        %527 = vmatmul.mubr.f32.gmra.mxu0 %v437
        %v528 = vpop.f32.mrf.mxu0
        %v529 = vadd.f32 %v460, %v528
        %v530 = vpop.f32.mrf.mxu0
        %531 = vmatprep.mubr.f32.mxu0 0.0
        %532 = vmatmul.mubr.f32.gmra.mxu0 %v438
        %v533 = vpop.f32.mrf.mxu0
        %v534 = vadd.f32 %v460, %v533
        %v535 = vpop.f32.mrf.mxu0
        %536 = vdwg.mxu0
        %v537 = vld [vmem:[%s371] sm:$0xff]
        %v538 = vld [vmem:[%s371 + $0x8] sm:$0xff]
        %v539 = vld [vmem:[%s371 + $0x10] sm:$0xff]
        %v540 = vld [vmem:[%s371 + $0x18] sm:$0xff]
        %v541 = vld [vmem:[%s371 + $0x20] sm:$0xff]
        %v542 = vld [vmem:[%s371 + $0x28] sm:$0xff]
        %v543 = vld [vmem:[%s371 + $0x30] sm:$0xff]
        %v544 = vld [vmem:[%s371 + $0x38] sm:$0xff]
        %v545 = vld [vmem:[%s371 + $0x40] sm:$0xff]
        %v546 = vld [vmem:[%s371 + $0x48] sm:$0xff]
        %v547 = vld [vmem:[%s371 + $0x50] sm:$0xff]
        %v548 = vld [vmem:[%s371 + $0x58] sm:$0xff]
        %v549 = vld [vmem:[%s371 + $0x60] sm:$0xff]
        %v550 = vld [vmem:[%s371 + $0x68] sm:$0xff]
        %v551 = vld [vmem:[%s371 + $0x70] sm:$0xff]
        %v552 = vld [vmem:[%s371 + $0x78] sm:$0xff]
        %v553 = vld [vmem:[%s428] sm:$0x1]
        %v555 = vlaneseq
        %v556 = vshrl.u32 %v555, 7
        %v557 = vsub.s32 0, %v556
        %v558 = vrot.slane %v553, %v557
        %560 = vmatprep.subr.mxu0 0.0
        %561 = vmatpush1.msra.mxu0 %v552
        %562 = vmatprep.subr.mxu0 0.0
        %563 = vmatpush1.msra.mxu0 %v551
        %564 = vmatprep.subr.mxu0 0.0
        %565 = vmatpush1.msra.mxu0 %v550
        %566 = vmatprep.subr.mxu0 0.0
        %567 = vmatpush1.msra.mxu0 %v549
        %568 = vmatprep.subr.mxu0 0.0
        %569 = vmatpush1.msra.mxu0 %v548
        %570 = vmatprep.subr.mxu0 0.0
        %571 = vmatpush1.msra.mxu0 %v547
        %572 = vmatprep.subr.mxu0 0.0
        %573 = vmatpush1.msra.mxu0 %v546
        %574 = vmatprep.subr.mxu0 0.0
        %575 = vmatpush1.msra.mxu0 %v545
        %576 = vmatprep.subr.mxu0 0.0
        %577 = vmatpush1.msra.mxu0 %v544
        %578 = vmatprep.subr.mxu0 0.0
        %579 = vmatpush1.msra.mxu0 %v543
        %580 = vmatprep.subr.mxu0 0.0
        %581 = vmatpush1.msra.mxu0 %v542
        %582 = vmatprep.subr.mxu0 0.0
        %583 = vmatpush1.msra.mxu0 %v541
        %584 = vmatprep.subr.mxu0 0.0
        %585 = vmatpush1.msra.mxu0 %v540
        %586 = vmatprep.subr.mxu0 0.0
        %587 = vmatpush1.msra.mxu0 %v539
        %588 = vmatprep.subr.mxu0 0.0
        %589 = vmatpush1.msra.mxu0 %v538
        %590 = vmatprep.subr.mxu0 0.0
        %591 = vmatpush1.msra.mxu0 %v537
        %592 = vmatprep.subr.mxu0 0.0
        %593 = vmatpush2.msra.mxu0 0.0
        %594 = vmatprep.subr.mxu0 0.0
        %595 = vmatpush2.msra.mxu0 0.0
        %596 = vmatprep.subr.mxu0 0.0
        %597 = vmatpush2.msra.mxu0 0.0
        %598 = vmatprep.subr.mxu0 0.0
        %599 = vmatpush2.msra.mxu0 0.0
        %600 = vmatprep.subr.mxu0 0.0
        %601 = vmatpush2.msra.mxu0 0.0
        %602 = vmatprep.subr.mxu0 0.0
        %603 = vmatpush2.msra.mxu0 0.0
        %604 = vmatprep.subr.mxu0 0.0
        %605 = vmatpush2.msra.mxu0 0.0
        %606 = vmatprep.subr.mxu0 0.0
        %607 = vmatpush2.msra.mxu0 0.0
        %608 = vmatprep.subr.mxu0 0.0
        %609 = vmatpush2.msra.mxu0 0.0
        %610 = vmatprep.subr.mxu0 0.0
        %611 = vmatpush2.msra.mxu0 0.0
        %612 = vmatprep.subr.mxu0 0.0
        %613 = vmatpush2.msra.mxu0 0.0
        %614 = vmatprep.subr.mxu0 0.0
        %615 = vmatpush2.msra.mxu0 0.0
        %616 = vmatprep.subr.mxu0 0.0
        %617 = vmatpush2.msra.mxu0 0.0
        %618 = vmatprep.subr.mxu0 0.0
        %619 = vmatpush2.msra.mxu0 0.0
        %620 = vmatprep.subr.mxu0 0.0
        %621 = vmatpush2.msra.mxu0 0.0
        %622 = vmatprep.subr.mxu0 0.0
        %623 = vmatpush2.msra.mxu0 0.0
        %624 = vmatprep.mubr.f32.mxu0 0.0
        %625 = vmatmul.mubr.f32.gmra.mxu0 %v437
        %v626 = vpop.f32.mrf.mxu0
        %v627 = vadd.f32 %v558, %v626
        %v628 = vpop.f32.mrf.mxu0
        %629 = vmatprep.mubr.f32.mxu0 0.0
        %630 = vmatmul.mubr.f32.gmra.mxu0 %v438
        %v631 = vpop.f32.mrf.mxu0
        %v632 = vadd.f32 %v558, %v631
        %v633 = vpop.f32.mrf.mxu0
        %634 = vdwg.mxu0
        %v635 = vxor.u32 %v529, 2147483648
        %v636 = vxor.u32 %v534, 2147483648
        %v637 = vmul.f32 %v635, 1.442695
        %v638 = vpow.pop %v637
        %v639 = vmul.f32 %v636, 1.442695
        %v640 = vpow.pop %v639
        %v641 = vadd.f32 %v638, 1.0
        %v642 = vadd.f32 %v640, 1.0
        %v643 = vrcp.pop %v641
        %v644 = vmul.f32 1.0, %v643
        %v645 = vrcp.pop %v642
        %v646 = vmul.f32 1.0, %v645
        %v647 = vmul.f32 %v529, %v644
        %v648 = vmul.f32 %v534, %v646
        %v649 = vmul.f32 %v647, %v627
        %v650 = vmul.f32 %v648, %v632
        %v651 = vld [vmem:[#allocation10] sm:$0xff]
        %v652 = vld [vmem:[#allocation10 + $0x8] sm:$0xff]
        %v653 = vld [vmem:[%s380] sm:$0xff]
        %v654 = vld [vmem:[%s380 + $0x8] sm:$0xff]
        %v655 = vld [vmem:[%s380 + $0x10] sm:$0xff]
        %v656 = vld [vmem:[%s380 + $0x18] sm:$0xff]
        %v657 = vld [vmem:[%s380 + $0x20] sm:$0xff]
        %v658 = vld [vmem:[%s380 + $0x28] sm:$0xff]
        %v659 = vld [vmem:[%s380 + $0x30] sm:$0xff]
        %v660 = vld [vmem:[%s380 + $0x38] sm:$0xff]
        %v661 = vld [vmem:[%s380 + $0x40] sm:$0xff]
        %v662 = vld [vmem:[%s380 + $0x48] sm:$0xff]
        %v663 = vld [vmem:[%s380 + $0x50] sm:$0xff]
        %v664 = vld [vmem:[%s380 + $0x58] sm:$0xff]
        %v665 = vld [vmem:[%s380 + $0x60] sm:$0xff]
        %v666 = vld [vmem:[%s380 + $0x68] sm:$0xff]
        %v667 = vld [vmem:[%s380 + $0x70] sm:$0xff]
        %v668 = vld [vmem:[%s380 + $0x78] sm:$0xff]
        %669 = vmatprep.subr.mxu0 0.0
        %670 = vmatpush1.msra.mxu0 %v668
        %671 = vmatprep.subr.mxu0 0.0
        %672 = vmatpush1.msra.mxu0 %v667
        %673 = vmatprep.subr.mxu0 0.0
        %674 = vmatpush1.msra.mxu0 %v666
        %675 = vmatprep.subr.mxu0 0.0
        %676 = vmatpush1.msra.mxu0 %v665
        %677 = vmatprep.subr.mxu0 0.0
        %678 = vmatpush1.msra.mxu0 %v664
        %679 = vmatprep.subr.mxu0 0.0
        %680 = vmatpush1.msra.mxu0 %v663
        %681 = vmatprep.subr.mxu0 0.0
        %682 = vmatpush1.msra.mxu0 %v662
        %683 = vmatprep.subr.mxu0 0.0
        %684 = vmatpush1.msra.mxu0 %v661
        %685 = vmatprep.subr.mxu0 0.0
        %686 = vmatpush1.msra.mxu0 %v660
        %687 = vmatprep.subr.mxu0 0.0
        %688 = vmatpush1.msra.mxu0 %v659
        %689 = vmatprep.subr.mxu0 0.0
        %690 = vmatpush1.msra.mxu0 %v658
        %691 = vmatprep.subr.mxu0 0.0
        %692 = vmatpush1.msra.mxu0 %v657
        %693 = vmatprep.subr.mxu0 0.0
        %694 = vmatpush1.msra.mxu0 %v656
        %695 = vmatprep.subr.mxu0 0.0
        %696 = vmatpush1.msra.mxu0 %v655
        %697 = vmatprep.subr.mxu0 0.0
        %698 = vmatpush1.msra.mxu0 %v654
        %699 = vmatprep.subr.mxu0 0.0
        %700 = vmatpush1.msra.mxu0 %v653
        %701 = vmatprep.subr.mxu0 0.0
        %702 = vmatpush2.msra.mxu0 0.0
        %703 = vmatprep.subr.mxu0 0.0
        %704 = vmatpush2.msra.mxu0 0.0
        %705 = vmatprep.subr.mxu0 0.0
        %706 = vmatpush2.msra.mxu0 0.0
        %707 = vmatprep.subr.mxu0 0.0
        %708 = vmatpush2.msra.mxu0 0.0
        %709 = vmatprep.subr.mxu0 0.0
        %710 = vmatpush2.msra.mxu0 0.0
        %711 = vmatprep.subr.mxu0 0.0
        %712 = vmatpush2.msra.mxu0 0.0
        %713 = vmatprep.subr.mxu0 0.0
        %714 = vmatpush2.msra.mxu0 0.0
        %715 = vmatprep.subr.mxu0 0.0
        %716 = vmatpush2.msra.mxu0 0.0
        %717 = vmatprep.subr.mxu0 0.0
        %718 = vmatpush2.msra.mxu0 0.0
        %719 = vmatprep.subr.mxu0 0.0
        %720 = vmatpush2.msra.mxu0 0.0
        %721 = vmatprep.subr.mxu0 0.0
        %722 = vmatpush2.msra.mxu0 0.0
        %723 = vmatprep.subr.mxu0 0.0
        %724 = vmatpush2.msra.mxu0 0.0
        %725 = vmatprep.subr.mxu0 0.0
        %726 = vmatpush2.msra.mxu0 0.0
        %727 = vmatprep.subr.mxu0 0.0
        %728 = vmatpush2.msra.mxu0 0.0
        %729 = vmatprep.subr.mxu0 0.0
        %730 = vmatpush2.msra.mxu0 0.0
        %731 = vmatprep.subr.mxu0 0.0
        %732 = vmatpush2.msra.mxu0 0.0
        %733 = vmatprep.mubr.f32.mxu0 0.0
        %734 = vmatmul.mubr.f32.gmra.mxu0 %v649
        %v735 = vpop.f32.mrf.mxu0
        %v736 = vadd.f32 0.0, %v735
        %v737 = vpop.f32.mrf.mxu0
        %738 = vmatprep.mubr.f32.mxu0 0.0
        %739 = vmatmul.mubr.f32.gmra.mxu0 %v650
        %v740 = vpop.f32.mrf.mxu0
        %v741 = vadd.f32 0.0, %v740
        %v742 = vpop.f32.mrf.mxu0
        %743 = vdwg.mxu0
        %v744 = vadd.f32 %v651, %v736
        %v745 = vadd.f32 %v652, %v741
        %746 = vst [vmem:[#allocation10] sm:$0xff] %v744
        %747 = vst [vmem:[#allocation10 + $0x8] sm:$0xff] %v745
        %p748 = scmp.eq.s32.totalorder %s31, 1
        // Predicated region
        $region69: #{tpu_custom_call.1} parent=47 // pred_check
          %p749 = pneg %p748
        $region70: #{tpu_custom_call.1} parent=47 // pred_check_branch
          %751 = sbr.rel (%p749) target = $region72
        $region71: #{tpu_custom_call.1} parent=47 // pred_region
          %v752 = vld [vmem:[#allocation10] sm:$0xff]
          %v753 = vld [vmem:[#allocation10 + $0x8] sm:$0xff]
          %v754 = vld [vmem:[%s6] sm:$0x1]
          %v756 = vlaneseq
          %v757 = vshrl.u32 %v756, 7
          %v758 = vsub.s32 0, %v757
          %v759 = vrot.slane %v754, %v758
          %v761 = vadd.f32 %v752, %v759
          %v762 = vadd.f32 %v753, %v759
          %763 = vst [vmem:[#allocation10] sm:$0xff] %v761
          %764 = vst [vmem:[#allocation10 + $0x8] sm:$0xff] %v762
        $region72: #{tpu_custom_call.1} parent=47 // pred_fallthru
          _
        // Predicated region
        $region73: #{tpu_custom_call.1} parent=47 // pred_check
          %p765 = pneg %p233
        $region74: #{tpu_custom_call.1} parent=47 // pred_check_branch
          %767 = sbr.rel (%p765) target = $region76
        $region75: #{tpu_custom_call.1} parent=47 // pred_region
          %s768 = smul.u32 2, %s30
          %s770 = ssub.s32 256, 256
          %771 = vsyncadd [#allocation4], %s770
          %s772 = smul.addr %s768, 128
          %s773 = scalar_lea.hbm %s7, %s772
          %s774 = sshll.u32 [#allocation10], 4
          %s775 = int_to_ptr.vmem [resolvable:$true] %s774
          %780 = dma.vmem_to_hbm [thread:$0]  %s775, 256, %s773, [#allocation4], 128, 128, 8
        $region76: #{tpu_custom_call.1} parent=47 // pred_fallthru
          _
        // Predicated region
        $region77: #{tpu_custom_call.1} parent=47 // pred_check
          %p781 = pneg %p233
        $region78: #{tpu_custom_call.1} parent=47 // pred_check_branch
          %783 = sbr.rel (%p781) target = $region80
        $region79: #{tpu_custom_call.1} parent=47 // pred_region
          %784 = dma.done [#allocation4], 256
        $region80: #{tpu_custom_call.1} parent=47 // pred_fallthru
          _
      $region48: #{tpu_custom_call.1} parent=5 // pred_fallthru
        _
      %p785 = scmp.le.s32.totalorder 2, %s21
      // Predicated region
      $region81: #{tpu_custom_call.1} parent=5 // pred_check
        %p786 = pneg %p785
      $region82: #{tpu_custom_call.1} parent=5 // pred_check_branch
        %788 = sbr.rel (%p786) target = $region84
      $region83: #{tpu_custom_call.1} parent=5 // pred_region
        %s789 = ssub.s32 %s21, 2
      $region84: #{tpu_custom_call.1} parent=5 // pred_fallthru
        _
    $region6: #{tpu_custom_call.1} parent=1 // loop_footer
      %s25 = sadd.s32 1, %s21
    $region7: #{tpu_custom_call.1} parent=1 // loop_footer_branch
      %20 = sbr.rel target = $region3
    $region8: #{tpu_custom_call.1} parent=1 // loop_exit
      _
    %790 = vsyncpa [#allocation3], 1
    %s791 = scalar_lea.sflag [#allocation3], 1
    %792 = vsyncpa %s791, 1
    %793 = vsyncpa [#allocation6], 1
    %s794 = scalar_lea.sflag [#allocation6], 1
    %795 = vsyncpa %s794, 1
    %796 = vsyncpa [#allocation9], 1
    %s797 = scalar_lea.sflag [#allocation9], 1
    %798 = vsyncpa %s797, 1
    %799 = vsyncpa [#allocation4], 1
    %s800 = scalar_lea.sflag [#allocation4], 1
    %801 = vsyncpa %s800, 1

</llo_original>
